<compile_context>
chip_gen: v5e
topology: v5e:2x2
jax: 0.10.0
libtpu: 0.0.40
codegen_flags: <defaults>
</compile_context>

<pallas_src>
import functools
import math

import jax
import jax.numpy as jnp
from jax.experimental import pallas as pl
from jax.experimental.pallas import tpu as pltpu

# ---- constants used by the original l0_module.py -------------------------
LIMIT_A = -0.1
LIMIT_B = 1.1
EPSILON = 1e-6

LANES = 128
SUBLANES = 8


# ---------------------------------------------------------------------------
# Pallas kernel: hard-concrete sample
#   z = hardtanh(quantile_concrete(eps, loga), 0, 1)
# folded to: z = clip(scale * tanh((log(eps/(1-eps)) + loga) * 0.5/T) + shift, 0, 1)
# ---------------------------------------------------------------------------
def _sample_z_kernel(loga_ref, eps_ref, z_ref, *, half_inv_temp, scale, shift):
    loga = loga_ref[...]
    eps = eps_ref[...]
    # log(eps) - log(1-eps) == log(eps / (1-eps)):
    # one vlog + one f32 divide (EUP recip + VALU refine) instead of two vlogs.
    logit = jnp.log(eps / (1.0 - eps))
    x = (logit + loga) * jnp.float32(half_inv_temp)
    # sigmoid -> *(limit_b-limit_a) -> +limit_a -> hardtanh, folded:
    #   sigmoid(t) = 0.5*tanh(t/2) + 0.5  =>  z_pre = scale*tanh(x) + shift
    z = jnp.float32(scale) * jnp.tanh(x) + jnp.float32(shift)
    z_ref[...] = jnp.clip(z, 0.0, 1.0)


def sample_z_pallas(loga_slab, eps_slab, temperature, num_blocks):
    """Hard-concrete sampling over a lane-dense (8, W) f32 slab -> z slab."""
    rows, W = loga_slab.shape
    assert rows == SUBLANES and W % (LANES * num_blocks) == 0
    bw = W // num_blocks

    kernel = functools.partial(
        _sample_z_kernel,
        half_inv_temp=0.5 / temperature,
        scale=0.5 * (LIMIT_B - LIMIT_A),              # 0.6
        shift=0.5 * (LIMIT_B - LIMIT_A) + LIMIT_A,    # 0.5
    )
    spec = pl.BlockSpec((rows, bw), lambda i: (0, i))

    return pl.pallas_call(
        kernel,
        out_shape=jax.ShapeDtypeStruct((rows, W), jnp.float32),
        grid=(num_blocks,),
        in_specs=[spec, spec],
        out_specs=spec,
        compiler_params=pltpu.CompilerParams(
            dimension_semantics=("parallel",),   # v7x: shards blocks over 2 TCs
        ),
    )(loga_slab, eps_slab)


def _choose_num_blocks(n_valid):
    """Coarse column-block count: 1 for tiny slabs; 2-8 once there's enough work
    to (a) feed v7x's second TensorCore and (b) overlap DMA with EUP compute on
    single-TC chips.  Keeps per-block VMEM under the v5e 16 MiB scoped default."""
    n_tiles = max(1, -(-n_valid // (SUBLANES * LANES)))
    if n_valid >= 256 * 1024:
        blocks = 8
    elif n_valid >= 64 * 1024:
        blocks = 4
    elif n_valid >= 16 * 1024:
        blocks = 2
    else:
        blocks = 1
    blocks = min(blocks, n_tiles)
    # VMEM guard: ~6 live buffers (2-deep pipeline x {2 in, 1 out}) per block.
    max_block_bytes = 2 * 1024 * 1024   # 6 * 2 MiB = 12 MiB < 16 MiB scoped (v5e)
    bytes_per_block = 4 * (-(-n_valid // blocks))
    while blocks < n_tiles and bytes_per_block > max_block_bytes:
        blocks = min(blocks * 2, n_tiles)
        bytes_per_block = 4 * (-(-n_valid // blocks))
    return blocks


# ---------------------------------------------------------------------------
# jitted forward implementation (uniform draw + kernel + slice/reshape glue)
# ---------------------------------------------------------------------------
def _forward_impl(loga_slab, key, *, temperature, num_blocks, n_valid,
                  types, offsets, shapes):
    rows, W = loga_slab.shape
    # uniform eps in [EPSILON, 1-EPSILON), drawn directly at slab shape
    eps_slab = jax.random.uniform(
        key, (rows, W), dtype=jnp.float32,
        minval=EPSILON, maxval=1.0 - EPSILON,
    )
    z_slab = sample_z_pallas(loga_slab, eps_slab, temperature, num_blocks)

    z_flat = z_slab.reshape(-1)
    eps_flat = eps_slab.reshape(-1)

    # split back into per-type zs (static slices) and reshape to broadcast shapes
    zs = {}
    for t in types:
        off, n = offsets[t]
        zs[f"{t}_z"] = z_flat[off:off + n].reshape(shapes[t])
    return zs, eps_flat[:n_valid], z_flat[:n_valid]


# ---------------------------------------------------------------------------
# L0Module (JAX) — parameter setup + forward glue
# ---------------------------------------------------------------------------
class L0ModuleJax:
    def __init__(self, hidden_size, intermediate_size, num_attention_heads,
                 num_hidden_layers, vocab_size=100, droprate_init=0.5,
                 temperature=2.0 / 3.0, magical_number=0.8, key=None):
        self.hidden_size = hidden_size
        self.intermediate_size = intermediate_size
        self.num_attention_heads = num_attention_heads
        self.num_hidden_layers = num_hidden_layers
        self.temperature = temperature
        self.droprate_init = droprate_init if droprate_init != 0.0 else 0.5
        self.magical_number = magical_number

        L, H, I, D = num_hidden_layers, num_attention_heads, intermediate_size, hidden_size

        # pruning_type = 'structured_heads+structured_mlp+hidden+layer'
        # -> types (in registration order): head, intermediate, hidden, mlp, head_layer
        self.types = ["head", "intermediate", "hidden", "mlp", "head_layer"]
        self.loga_shapes = {            # raw parameter shapes
            "head": (L, H),
            "intermediate": (L, I),
            "hidden": (D,),
            "mlp": (L,),
            "head_layer": (L,),
        }
        self.shapes = {                 # broadcast shapes used by forward()
            "head": (L, 1, H, 1, 1),
            "intermediate": (L, 1, 1, I),
            "hidden": (D,),
            "mlp": (L,),
            "head_layer": (L,),
        }
        # reset_loga: default mean = log(1-p) - log(p) = 0 for p=0.5,
        # mean=10 for head/hidden/mlp/head_layer (see original __init__).
        default_mean = math.log(1 - self.droprate_init) - math.log(self.droprate_init)
        means = {
            "head": 10.0,
            "intermediate": default_mean,
            "hidden": 10.0,
            "mlp": 10.0,
            "head_layer": 10.0,
        }

        if key is None:
            key = jax.random.PRNGKey(0)
        self.z_logas = {}
        for t in self.types:
            key, sub = jax.random.split(key)
            shp = self.loga_shapes[t]
            self.z_logas[t] = (
                means[t] + 0.01 * jax.random.normal(sub, shp, dtype=jnp.float32)
            )

        # ---- pre-pack all logas into one persistent lane-dense (8, W) slab ----
        self.offsets = {}
        off = 0
        flats = []
        for t in self.types:
            n = int(math.prod(self.loga_shapes[t]))
            self.offsets[t] = (off, n)
            flats.append(self.z_logas[t].reshape(-1))
            off += n
        self.n_valid = off
        self.loga_flat = jnp.concatenate(flats).astype(jnp.float32)

        self.num_blocks = _choose_num_blocks(self.n_valid)
        align = SUBLANES * LANES * self.num_blocks
        padded = ((self.n_valid + align - 1) // align) * align
        self.slab_width = padded // SUBLANES
        # padded tail holds loga=0; its z values are computed but never exposed
        self.loga_slab = (
            jnp.zeros((padded,), jnp.float32)
            .at[: self.n_valid]
            .set(self.loga_flat)
            .reshape(SUBLANES, self.slab_width)
        )

        # single jit over the whole forward (RNG + kernel + slice/reshape glue)
        self._forward_jit = jax.jit(functools.partial(
            _forward_impl,
            temperature=self.temperature,
            num_blocks=self.num_blocks,
            n_valid=self.n_valid,
            types=tuple(self.types),
            offsets=dict(self.offsets),
            shapes=dict(self.shapes),
        ))

    def forward(self, key, training=True):
        if not training:
            # TODO(synk): deterministic eval path (_deterministic_z) uses topk-based
            # hard zeroing; not ported to Pallas here.
            raise NotImplementedError
        return self._forward_jit(self.loga_slab, key)


# ---------------------------------------------------------------------------
def _reference_sample_z(loga_flat, eps_flat, temperature):
    y = jax.nn.sigmoid(
        (jnp.log(eps_flat) - jnp.log(1.0 - eps_flat) + loga_flat) / temperature
    )
    z = y * (LIMIT_B - LIMIT_A) + LIMIT_A
    return jnp.clip(z, 0.0, 1.0)


if __name__ == "__main__":
    key = jax.random.PRNGKey(0)
    k_init, k_fwd = jax.random.split(key)

    # small config: hidden=32, intermediate=64, heads=4, layers=2
    mod = L0ModuleJax(
        hidden_size=32,
        intermediate_size=64,
        num_attention_heads=4,
        num_hidden_layers=2,
        vocab_size=100,
        key=k_init,
    )

    zs, eps_flat, z_flat = mod.forward(k_fwd, training=True)
    jax.block_until_ready(zs)

    # sanity-check against a pure-JAX reference of the same math, using the
    # exact eps values fed to the kernel
    ref = _reference_sample_z(mod.loga_flat, eps_flat, mod.temperature)
    got = jnp.concatenate([zs[f"{t}_z"].reshape(-1) for t in mod.types])
    assert got.shape == ref.shape
    assert bool(jnp.allclose(got, ref, atol=1e-5, rtol=1e-5))
    assert bool(jnp.all((eps_flat >= EPSILON) & (eps_flat <= 1.0 - EPSILON)))
    assert bool(jnp.all((got >= 0.0) & (got <= 1.0)))

    # shape checks matching the PyTorch module's reshape targets
    assert zs["head_z"].shape == (2, 1, 4, 1, 1)
    assert zs["intermediate_z"].shape == (2, 1, 1, 64)
    assert zs["hidden_z"].shape == (32,)
    assert zs["mlp_z"].shape == (2,)
    assert zs["head_layer_z"].shape == (2,)

    print("KERNEL_OK")
</pallas_src>

<mosaic_0001>
module attributes {stable_mosaic.version = 11 : i64} {
  func.func @_sample_z_kernel(%arg0: i32, %arg1: memref<8x128xf32, #tpu.memory_space<vmem>>, %arg2: memref<8x128xf32, #tpu.memory_space<vmem>>, %arg3: memref<8x128xf32, #tpu.memory_space<vmem>>) attributes {dimension_semantics = [#tpu.dimension_semantics<parallel>], iteration_bounds = array<i64: 1>, scalar_prefetch = 0 : i64, scratch_operands = 0 : i64, tpu.core_type = #tpu.core_type<tc>, window_params = [{transform_indices = @transform_0, window_bounds = array<i64: 8, 128>}, {transform_indices = @transform_1, window_bounds = array<i64: 8, 128>}, {transform_indices = @transform_2, window_bounds = array<i64: 8, 128>}]} {
    %c0 = arith.constant 0 : index
    %c0_0 = arith.constant 0 : index
    %0 = vector.load %arg1[%c0, %c0_0] : memref<8x128xf32, #tpu.memory_space<vmem>>, vector<8x128xf32>
    %c0_1 = arith.constant 0 : index
    %c0_2 = arith.constant 0 : index
    %1 = vector.load %arg2[%c0_1, %c0_2] : memref<8x128xf32, #tpu.memory_space<vmem>>, vector<8x128xf32>
    %cst = arith.constant 1.000000e+00 : f32
    %2 = vector.broadcast %cst : f32 to vector<8x128xf32>
    %3 = arith.subf %2, %1 : vector<8x128xf32>
    %4 = arith.divf %1, %3 : vector<8x128xf32>
    %5 = math.log %4 : vector<8x128xf32>
    %6 = arith.addf %5, %0 : vector<8x128xf32>
    %cst_3 = arith.constant 7.500000e-01 : f32
    %7 = vector.broadcast %cst_3 : f32 to vector<8x128xf32>
    %8 = arith.mulf %6, %7 : vector<8x128xf32>
    %9 = math.tanh %8 : vector<8x128xf32>
    %cst_4 = arith.constant 6.000000e-01 : f32
    %10 = vector.broadcast %cst_4 : f32 to vector<8x128xf32>
    %11 = arith.mulf %10, %9 : vector<8x128xf32>
    %cst_5 = arith.constant 5.000000e-01 : f32
    %12 = vector.broadcast %cst_5 : f32 to vector<8x128xf32>
    %13 = arith.addf %11, %12 : vector<8x128xf32>
    %cst_6 = arith.constant 0.000000e+00 : f32
    %cst_7 = arith.constant 1.000000e+00 : f32
    %14 = vector.broadcast %cst_6 : f32 to vector<8x128xf32>
    %15 = arith.maximumf %14, %13 : vector<8x128xf32>
    %16 = vector.broadcast %cst_7 : f32 to vector<8x128xf32>
    %17 = arith.minimumf %16, %15 : vector<8x128xf32>
    %c0_8 = arith.constant 0 : index
    %c0_9 = arith.constant 0 : index
    %18 = vector.load %arg3[%c0_8, %c0_9] : memref<8x128xf32, #tpu.memory_space<vmem>>, vector<8x128xf32>
    tpu.vector_store %arg3[%c0_8, %c0_9], %17 {strides = array<i32>} : memref<8x128xf32, #tpu.memory_space<vmem>>, vector<8x128xf32>,
    return
  }
  func.func @transform_0(%arg0: i32) -> (i32, i32) {
    %c0_i32 = arith.constant 0 : i32
    %c0_i32_0 = arith.constant 0 : i32
    return %c0_i32, %arg0 : i32, i32
  }
  func.func @transform_1(%arg0: i32) -> (i32, i32) {
    %c0_i32 = arith.constant 0 : i32
    %c0_i32_0 = arith.constant 0 : i32
    return %c0_i32, %arg0 : i32, i32
  }
  func.func @transform_2(%arg0: i32) -> (i32, i32) {
    %c0_i32 = arith.constant 0 : i32
    %c0_i32_0 = arith.constant 0 : i32
    return %c0_i32, %arg0 : i32, i32
  }
}

</mosaic_0001>

<llo_original>
// kernel: _forward_impl.1
$region0: #{_forward_impl.1}
  #allocation0 [shape = 'u32[]', space=smem, size = 0x4, offset = 0x4, fixed_abs, tag = 'smem constant byte address 0x4 - core index']
  #allocation1 [shape = 'u32[72,128]{1,0:T(1,128)}', space=vmem, size = 0x9000, scoped, tag = 'internal scratch']
  %s0 = inlined_call_operand.vmem [shape: f32[8,128], index: 0, kind: input, shape index: {}]
  %s1 = inlined_call_operand.vmem [shape: f32[8,128], index: 1, kind: input, shape index: {}]
  %s2 = inlined_call_operand.vmem [shape: f32[8,128], index: 2, kind: output, shape index: {}]
  %s3 = sld [smem:[#allocation0]]
  $region18: #{_forward_impl.1} parent=0
    _
  %s5 = ssub.s32 1, %s3
  %s6 = scalar_select 0, %s5, %s3
  // Predicated region
  $region2: #{_forward_impl.1} parent=0 // pred_check
    _
  $region3: #{_forward_impl.1} parent=0 // pred_check_branch
    %8 = sbr.rel (0) target = $region5
  $region4: #{_forward_impl.1} parent=0 // pred_region
    _
  $region5: #{_forward_impl.1} parent=0 // pred_fallthru
    _
  // Predicated region
  $region6: #{_forward_impl.1} parent=0 // pred_check
    _
  $region7: #{_forward_impl.1} parent=0 // pred_check_branch
    %10 = sbr.rel (0) target = $region9
  $region8: #{_forward_impl.1} parent=0 // pred_region
    _
  $region9: #{_forward_impl.1} parent=0 // pred_fallthru
    _
  %v11 = vld [vmem:[%s0] sm:$0xff]
  %v12 = vld [vmem:[%s1] sm:$0xff]
  %v13 = vsub.f32 1.0, %v12
  %v14 = vrcp.pop %v13
  %v15 = vmul.f32 %v13, %v14
  %v16 = vsub.f32 1.0, %v15
  %v17 = vmul.f32 %v14, %v16
  %v18 = vadd.f32 %v14, %v17
  %vm19 = vweird.f32 %v13
  %vm20 = vweird.f32 %v14
  %vm21 = vmor %vm19, %vm20
  %v22 = vsel %vm21, %v14, %v18
  %v23 = vand.u32 2147483647, %v13
  %vm24 = vcmp.eq.f32.partialorder %v23, 8.507059e+37
  %v25 = vand.u32 %v13, 2147483648
  %v26 = vor.u32 1.1754944e-38, %v25
  %v27 = vsel %vm24, %v26, %v22
  %v28 = vmul.f32 %v12, %v27
  %v29 = vlog2.pop %v28
  %v30 = vmul.f32 %v29, 0.6931472
  %v31 = vadd.f32 %v30, %v11
  %v32 = vmul.f32 %v31, 0.75
  %v33 = vtanh.pop %v32
  %v34 = vmul.f32 %v33, 0.6
  %v35 = vadd.f32 %v34, 0.5
  %v36 = vmax.f32 %v35, 0.0
  %v37 = vmin.f32 %v36, 1.0
  %38 = vst [vmem:[%s2] sm:$0xff] %v37
  // Predicated region
  $region10: #{_forward_impl.1} parent=0 // pred_check
    _
  $region11: #{_forward_impl.1} parent=0 // pred_check_branch
    %40 = sbr.rel (0) target = $region13
  $region12: #{_forward_impl.1} parent=0 // pred_region
    _
  $region13: #{_forward_impl.1} parent=0 // pred_fallthru
    _
  // Predicated region
  $region14: #{_forward_impl.1} parent=0 // pred_check
    _
  $region15: #{_forward_impl.1} parent=0 // pred_check_branch
    %42 = sbr.rel (0) target = $region17
  $region16: #{_forward_impl.1} parent=0 // pred_region
    _
  $region17: #{_forward_impl.1} parent=0 // pred_fallthru
    _

</llo_original>
